<compile_context>
chip_gen: v5e
topology: v5e:2x2
jax: 0.10.0
libtpu: 0.0.40
codegen_flags: <defaults>
</compile_context>

<pallas_src>
import jax
import jax.numpy as jnp
from jax.experimental import pallas as pl
from jax.experimental.pallas import tpu as pltpu


def adapter_kernel(x_ref, w1_ref, b1_ref, w2_ref, b2_ref, o_ref):
    # x_ref: (TN, D)       | w1_ref: (D, M) bf16 | b1_ref: (1, M) f32
    # w2_ref: (M, D) bf16  | b2_ref: (1, D) f32  | o_ref: (TN, D)
    x = x_ref[...]  # kept for the residual

    # down-projection: bf16 MXU inputs, f32 accumulation, bias + ReLU in f32
    h = jnp.dot(x.astype(jnp.bfloat16), w1_ref[...],
                preferred_element_type=jnp.float32)
    h = jnp.maximum(h + b1_ref[...], 0.0)

    # up-projection
    y = jnp.dot(h.astype(jnp.bfloat16), w2_ref[...],
                preferred_element_type=jnp.float32)

    # up-projection bias + residual fused into one f32 elementwise pass
    o_ref[...] = (y + x.astype(jnp.float32) + b2_ref[...]).astype(o_ref.dtype)


def _round_up(v, m):
    return ((v + m - 1) // m) * m


def _vmem_budget():
    """Returns (scoped vmem_limit_bytes, budget for this kernel's buffers)."""
    phys = None
    try:
        info = pltpu.get_tpu_info()
        phys = int(getattr(info, "vmem_capacity_bytes", 0)) or None
    except Exception:
        phys = None
    if phys is None or phys <= 64 * 1024 * 1024:
        # v7x (64 MiB physical per TensorCore) or unknown: be conservative,
        # leave headroom for compiler-internal scratch.
        return 48 * 1024 * 1024, 40 * 1024 * 1024
    # v5e / v6e: 128 MiB physical VMEM.
    return 100 * 1024 * 1024, 92 * 1024 * 1024


def _choose_tile(N, D, M, budget_bytes, itemsize):
    """Pick the token-tile height TN from the VMEM budget and problem size."""
    # Resident operands (double-buffered by the pipeline):
    #   two bf16 weight matrices + two f32 bias rows.
    resident = 2 * (2 * D * M * 2 + (M + D) * 4)
    streamed_budget = max(budget_bytes - resident, 1 << 20)

    # Streamed rows: x tile + out tile, each double-buffered.
    per_row = 2 * 2 * D * itemsize
    tn = streamed_budget // per_row

    # Past ~8 MiB per DMA tile the HBM pipeline is already at roofline.
    tn = min(tn, (8 * 1024 * 1024) // max(D * itemsize, 1))

    # Give both v7x TensorCores work when there is enough of it.
    if N >= 32:
        tn = min(tn, _round_up(pl.cdiv(N, 2), 16))

    # Never taller than the (sublane-rounded) token count.
    tn = min(tn, _round_up(N, 8))
    tn = max(tn, 8)

    # Rounding: multiples of 256 when large (v6e/v7x MXU row width),
    # otherwise multiples of 16 (bf16 packs 16 rows per vreg).
    if tn >= 256:
        tn = (tn // 256) * 256
    elif tn >= 16:
        tn = (tn // 16) * 16
    return int(tn)


def adapter_forward(x, w1, b1, w2, b2):
    """x: (B, S, D).  w1: (D, M), b1: (M,), w2: (M, D), b2: (D,).

    Computes relu(x @ w1 + b1) @ w2 + b2 + x  (PyTorch Adapter forward).
    """
    B, S, D = x.shape
    M = w1.shape[1]
    N = B * S
    itemsize = jnp.dtype(x.dtype).itemsize

    vmem_limit, budget = _vmem_budget()
    TN = _choose_tile(N, D, M, budget, itemsize)
    n_tiles = pl.cdiv(N, TN)

    # No padding of the token axis: Pallas masks the ragged final output
    # block; the garbage tail rows it computes on are never written back.
    x2d = x.reshape(N, D)

    # bf16 weights halve resident VMEM + weight HBM traffic; f32 biases.
    w1_b = w1.astype(jnp.bfloat16)
    w2_b = w2.astype(jnp.bfloat16)
    b1_2d = b1.reshape(1, M).astype(jnp.float32)
    b2_2d = b2.reshape(1, D).astype(jnp.float32)

    cost = pl.CostEstimate(
        flops=4 * N * D * M,                      # two (N, D, M) matmuls
        transcendentals=0,
        bytes_accessed=(2 * N * D * itemsize      # x in + out
                        + 2 * D * M * 2           # bf16 weights
                        + (M + D) * 4),           # f32 biases
    )

    out = pl.pallas_call(
        adapter_kernel,
        out_shape=jax.ShapeDtypeStruct((N, D), x.dtype),
        grid_spec=pltpu.PrefetchScalarGridSpec(
            num_scalar_prefetch=0,
            grid=(n_tiles,),
            in_specs=[
                pl.BlockSpec((TN, D), lambda i: (i, 0)),   # x tile (streamed)
                pl.BlockSpec((D, M), lambda i: (0, 0)),    # W1 (resident)
                pl.BlockSpec((1, M), lambda i: (0, 0)),    # b1 (resident)
                pl.BlockSpec((M, D), lambda i: (0, 0)),    # W2 (resident)
                pl.BlockSpec((1, D), lambda i: (0, 0)),    # b2 (resident)
            ],
            out_specs=pl.BlockSpec((TN, D), lambda i: (i, 0)),
        ),
        compiler_params=pltpu.CompilerParams(
            # token tiles are independent -> shard across both TCs on v7x
            dimension_semantics=("parallel",),
            # generation-aware scoped VMEM limit (see _vmem_budget)
            vmem_limit_bytes=vmem_limit,
        ),
        cost_estimate=cost,
    )(x2d, w1_b, b1_2d, w2_b, b2_2d)

    return out.reshape(B, S, D)


if __name__ == "__main__":
    # Small shapes consistent with the module's forward:
    # Adapter(size=6, model_dim=32) applied to x of shape (batch=2, seq=8, 32)
    size = 6
    model_dim = 32
    B, S = 2, 8

    key = jax.random.PRNGKey(0)
    kx, kw1, kb1, kw2, kb2 = jax.random.split(key, 5)

    x = jax.random.normal(kx, (B, S, model_dim), dtype=jnp.float32)
    # deterministic parameter init (scaled normals; shapes match nn.Linear)
    w1 = jax.random.normal(kw1, (model_dim, size), dtype=jnp.float32) * 0.1
    b1 = jax.random.normal(kb1, (size,), dtype=jnp.float32) * 0.1
    w2 = jax.random.normal(kw2, (size, model_dim), dtype=jnp.float32) * 0.1
    b2 = jax.random.normal(kb2, (model_dim,), dtype=jnp.float32) * 0.1

    out = adapter_forward(x, w1, b1, w2, b2)
    jax.block_until_ready(out)

    # sanity check against plain-JAX f32 reference (loose tol: bf16 matmuls)
    ref = jnp.maximum(x @ w1 + b1, 0.0) @ w2 + b2 + x
    assert out.shape == (B, S, model_dim)
    assert jnp.allclose(out, ref, atol=2e-2, rtol=2e-2), (
        float(jnp.max(jnp.abs(out - ref))))

    print("KERNEL_OK")
</pallas_src>

<mosaic_0001>
module attributes {stable_mosaic.version = 11 : i64} {
  func.func @adapter_kernel(%arg0: i32, %arg1: memref<16x32xf32, #tpu.memory_space<vmem>>, %arg2: memref<32x6xbf16, #tpu.memory_space<vmem>>, %arg3: memref<1x6xf32, #tpu.memory_space<vmem>>, %arg4: memref<6x32xbf16, #tpu.memory_space<vmem>>, %arg5: memref<1x32xf32, #tpu.memory_space<vmem>>, %arg6: memref<16x32xf32, #tpu.memory_space<vmem>>) attributes {dimension_semantics = [#tpu.dimension_semantics<parallel>], iteration_bounds = array<i64: 1>, scalar_prefetch = 0 : i64, scratch_operands = 0 : i64, tpu.core_type = #tpu.core_type<tc>, window_params = [{transform_indices = @transform_0, window_bounds = array<i64: 16, 32>}, {pipeline_mode = #tpu.pipeline_mode<synchronous>, transform_indices = @transform_1, window_bounds = array<i64: 32, 6>}, {pipeline_mode = #tpu.pipeline_mode<synchronous>, transform_indices = @transform_2, window_bounds = array<i64: 1, 6>}, {pipeline_mode = #tpu.pipeline_mode<synchronous>, transform_indices = @transform_3, window_bounds = array<i64: 6, 32>}, {pipeline_mode = #tpu.pipeline_mode<synchronous>, transform_indices = @transform_4, window_bounds = array<i64: 1, 32>}, {transform_indices = @transform_5, window_bounds = array<i64: 16, 32>}]} {
    %c0 = arith.constant 0 : index
    %c0_0 = arith.constant 0 : index
    %0 = vector.load %arg1[%c0, %c0_0] : memref<16x32xf32, #tpu.memory_space<vmem>>, vector<16x32xf32>
    %1 = arith.truncf %0 : vector<16x32xf32> to vector<16x32xbf16>
    %c0_1 = arith.constant 0 : index
    %c0_2 = arith.constant 0 : index
    %2 = vector.load %arg2[%c0_1, %c0_2] : memref<32x6xbf16, #tpu.memory_space<vmem>>, vector<32x6xbf16>
    %cst = arith.constant dense<0.000000e+00> : vector<16x6xf32>
    %3 = tpu.matmul %1, %2, %cst {dimension_numbers = #tpu.dot_dimension_numbers<[1], [0], [0], [1], [0, 0, 1, 1], [], []>} : vector<16x32xbf16>, vector<32x6xbf16>, vector<16x6xf32> -> vector<16x6xf32>
    %c0_3 = arith.constant 0 : index
    %c0_4 = arith.constant 0 : index
    %4 = vector.load %arg3[%c0_3, %c0_4] : memref<1x6xf32, #tpu.memory_space<vmem>>, vector<1x6xf32>
    %5 = vector.broadcast %4 : vector<1x6xf32> to vector<16x6xf32>
    %6 = arith.addf %3, %5 : vector<16x6xf32>
    %cst_5 = arith.constant 0.000000e+00 : f32
    %7 = vector.broadcast %cst_5 : f32 to vector<16x6xf32>
    %8 = arith.maximumf %6, %7 : vector<16x6xf32>
    %9 = arith.truncf %8 : vector<16x6xf32> to vector<16x6xbf16>
    %c0_6 = arith.constant 0 : index
    %c0_7 = arith.constant 0 : index
    %10 = vector.load %arg4[%c0_6, %c0_7] : memref<6x32xbf16, #tpu.memory_space<vmem>>, vector<6x32xbf16>
    %cst_8 = arith.constant dense<0.000000e+00> : vector<16x32xf32>
    %11 = tpu.matmul %9, %10, %cst_8 {dimension_numbers = #tpu.dot_dimension_numbers<[1], [0], [0], [1], [0, 0, 1, 1], [], []>} : vector<16x6xbf16>, vector<6x32xbf16>, vector<16x32xf32> -> vector<16x32xf32>
    %12 = arith.addf %11, %0 : vector<16x32xf32>
    %c0_9 = arith.constant 0 : index
    %c0_10 = arith.constant 0 : index
    %13 = vector.load %arg5[%c0_9, %c0_10] : memref<1x32xf32, #tpu.memory_space<vmem>>, vector<1x32xf32>
    %14 = vector.broadcast %13 : vector<1x32xf32> to vector<16x32xf32>
    %15 = arith.addf %12, %14 : vector<16x32xf32>
    %c0_11 = arith.constant 0 : index
    %c0_12 = arith.constant 0 : index
    %16 = vector.load %arg6[%c0_11, %c0_12] : memref<16x32xf32, #tpu.memory_space<vmem>>, vector<16x32xf32>
    tpu.vector_store %arg6[%c0_11, %c0_12], %15 {strides = array<i32>} : memref<16x32xf32, #tpu.memory_space<vmem>>, vector<16x32xf32>,
    return
  }
  func.func @transform_0(%arg0: i32) -> (i32, i32) {
    %c0_i32 = arith.constant 0 : i32
    %c0_i32_0 = arith.constant 0 : i32
    return %arg0, %c0_i32 : i32, i32
  }
  func.func @transform_1(%arg0: i32) -> (i32, i32) {
    %c0_i32 = arith.constant 0 : i32
    %c0_i32_0 = arith.constant 0 : i32
    %c0_i32_1 = arith.constant 0 : i32
    return %c0_i32, %c0_i32_0 : i32, i32
  }
  func.func @transform_2(%arg0: i32) -> (i32, i32) {
    %c0_i32 = arith.constant 0 : i32
    %c0_i32_0 = arith.constant 0 : i32
    %c0_i32_1 = arith.constant 0 : i32
    return %c0_i32, %c0_i32_0 : i32, i32
  }
  func.func @transform_3(%arg0: i32) -> (i32, i32) {
    %c0_i32 = arith.constant 0 : i32
    %c0_i32_0 = arith.constant 0 : i32
    %c0_i32_1 = arith.constant 0 : i32
    return %c0_i32, %c0_i32_0 : i32, i32
  }
  func.func @transform_4(%arg0: i32) -> (i32, i32) {
    %c0_i32 = arith.constant 0 : i32
    %c0_i32_0 = arith.constant 0 : i32
    %c0_i32_1 = arith.constant 0 : i32
    return %c0_i32, %c0_i32_0 : i32, i32
  }
  func.func @transform_5(%arg0: i32) -> (i32, i32) {
    %c0_i32 = arith.constant 0 : i32
    %c0_i32_0 = arith.constant 0 : i32
    return %arg0, %c0_i32 : i32, i32
  }
}

</mosaic_0001>

<llo_original>
// kernel: tpu_custom_call.1
$region0: #{tpu_custom_call.1}
  #allocation0 [shape = 'u32[]', space=smem, size = 0x4, offset = 0x4, fixed_abs, tag = 'smem constant byte address 0x4 - core index']
  #allocation1 [shape = 'u32[72,128]{1,0:T(1,128)}', space=vmem, size = 0x9000, scoped, tag = 'internal scratch']
  %s0 = inlined_call_operand.vmem [shape: f32[16,32], index: 0, kind: input, shape index: {}]
  %s1 = inlined_call_operand.vmem [shape: bf16[32,6], index: 1, kind: input, shape index: {}]
  %s2 = inlined_call_operand.vmem [shape: f32[1,6], index: 2, kind: input, shape index: {}]
  %s3 = inlined_call_operand.vmem [shape: bf16[6,32], index: 3, kind: input, shape index: {}]
  %s4 = inlined_call_operand.vmem [shape: f32[1,32], index: 4, kind: input, shape index: {}]
  %s5 = inlined_call_operand.hbm [shape: f32[16,32], index: 5, kind: output, shape index: {}]
  %s6 = sld [smem:[#allocation0]]
  $region30: #{tpu_custom_call.1} parent=0
    _
  %s8 = ssub.s32 1, %s6
  %s9 = scalar_select 0, %s8, %s6
  $region1: #{tpu_custom_call.1} parent=0
    #allocation2 [shape = 'u8[8192]{0}', space=vmem, size = 0x2000, scoped, tag = 'output window, operand 0, single buffered']
    #allocation3 [shape = 's32[1]{0}', space=sflag, size = 0x4, scoped, tag = 'scoped memory for tpu_custom_call.1']
    %10 = vsyncpa [#allocation3], 0
    // Predicated region
    $region2: #{tpu_custom_call.1} parent=1 // pred_check
      _
    $region3: #{tpu_custom_call.1} parent=1 // pred_check_branch
      %12 = sbr.rel (0) target = $region5
    $region4: #{tpu_custom_call.1} parent=1 // pred_region
      _
    $region5: #{tpu_custom_call.1} parent=1 // pred_fallthru
      _
    // Predicated region
    $region6: #{tpu_custom_call.1} parent=1 // pred_check
      _
    $region7: #{tpu_custom_call.1} parent=1 // pred_check_branch
      %14 = sbr.rel (0) target = $region9
    $region8: #{tpu_custom_call.1} parent=1 // pred_region
      _
    $region9: #{tpu_custom_call.1} parent=1 // pred_fallthru
      _
    // Predicated region
    $region10: #{tpu_custom_call.1} parent=1 // pred_check
      _
    $region11: #{tpu_custom_call.1} parent=1 // pred_check_branch
      %16 = sbr.rel (0) target = $region13
    $region12: #{tpu_custom_call.1} parent=1 // pred_region
      _
    $region13: #{tpu_custom_call.1} parent=1 // pred_fallthru
      _
    // Predicated region
    $region14: #{tpu_custom_call.1} parent=1 // pred_check
      _
    $region15: #{tpu_custom_call.1} parent=1 // pred_check_branch
      %18 = sbr.rel (0) target = $region17
    $region16: #{tpu_custom_call.1} parent=1 // pred_region
      _
    $region17: #{tpu_custom_call.1} parent=1 // pred_fallthru
      _
    // Predicated region
    $region18: #{tpu_custom_call.1} parent=1 // pred_check
      _
    $region19: #{tpu_custom_call.1} parent=1 // pred_check_branch
      %20 = sbr.rel (0) target = $region21
    $region20: #{tpu_custom_call.1} parent=1 // pred_region
      _
    $region21: #{tpu_custom_call.1} parent=1 // pred_fallthru
      _
    %v22 = vld [vmem:[%s0] sm:$0xff]
    %v23 = vld [vmem:[%s0 + $0x8] sm:$0xff]
    %v24 = vpack.c.bf16 %v23, %v22
    %v25 = vld [vmem:[%s1] sm:$0xf]
    %v26 = vld [vmem:[%s1 + $0x4] sm:$0xf]
    %v27 = vld [vmem:[%s1 + $0x8] sm:$0xf]
    %v28 = vld [vmem:[%s1 + $0xc] sm:$0xf]
    %v29 = vld [vmem:[%s2] sm:$0x1]
    %v31 = vperm.slane %v29, 0
    %v37 = vunpack.c.l.b16 %v25
    %v38 = vunpack.c.l.b16 %v26
    %v39 = vunpack.c.l.b16 %v27
    %v40 = vunpack.c.l.b16 %v28
    %v41 = vpack.c.b16 %v38, %v37
    %v42 = vpack.c.b16 %v40, %v39
    %vm45 = vcmask 261120
    %v47 = vsel %vm45, %v24, 0
    %49 = vmatpush.bf16.msra.mxu0 0
    %50 = vmatpush.bf16.msra.mxu0 0
    %51 = vmatpush.bf16.msra.mxu0 0
    %52 = vmatpush.bf16.msra.mxu0 0
    %53 = vmatpush.bf16.msra.mxu0 0
    %54 = vmatpush.bf16.msra.mxu0 0
    %55 = vmatpush.bf16.msra.mxu0 %v42
    %56 = vmatpush.bf16.msra.mxu0 %v41
    %57 = vmatmul.bf16.gmra.mxu0 %v47
    %v58 = vpop.f32.mrf.mxu0
    %v59 = vadd.f32 %v31, %v58
    %v60 = vpop.f32.mrf.mxu0
    %v61 = vadd.f32 %v31, %v60
    %62 = vdwg.mxu0
    %v63 = vmax.f32 %v59, 0.0
    %v64 = vmax.f32 %v61, 0.0
    %v65 = vpack.c.bf16 %v64, %v63
    %v66 = vld [vmem:[%s3] sm:$0x7]
    %vm67 = vcmask 48128
    %v69 = vsel %vm67, %v65, 0
    %vm71 = vcmask 1042432
    %v73 = vsel %vm71, %v66, 0
    %75 = vmatpush.bf16.msra.mxu0 0
    %76 = vmatpush.bf16.msra.mxu0 0
    %77 = vmatpush.bf16.msra.mxu0 0
    %78 = vmatpush.bf16.msra.mxu0 0
    %79 = vmatpush.bf16.msra.mxu0 0
    %80 = vmatpush.bf16.msra.mxu0 0
    %81 = vmatpush.bf16.msra.mxu0 0
    %82 = vmatpush.bf16.msra.mxu0 %v73
    %83 = vmatmul.bf16.gmra.mxu0 %v69
    %v84 = vpop.f32.mrf.mxu0
    %v85 = vadd.f32 %v22, %v84
    %v86 = vpop.f32.mrf.mxu0
    %v87 = vadd.f32 %v23, %v86
    %88 = vdwg.mxu0
    %v89 = vld [vmem:[%s4] sm:$0x1]
    %v91 = vperm.slane %v89, 0
    %v93 = vadd.f32 %v85, %v91
    %v94 = vadd.f32 %v87, %v91
    %95 = vst.msk [vmem:[#allocation2] sm:$0xff] %vm45, %v93
    %96 = vst.msk [vmem:[#allocation2 + $0x8] sm:$0xff] %vm45, %v94
    // Predicated region
    $region22: #{tpu_custom_call.1} parent=1 // pred_check
      _
    $region23: #{tpu_custom_call.1} parent=1 // pred_check_branch
      %98 = sbr.rel (0) target = $region25
    $region24: #{tpu_custom_call.1} parent=1 // pred_region
      %100 = vsyncadd [#allocation3], 0
      %s101 = sshll.u32 [#allocation2], 4
      %s102 = int_to_ptr.vmem [resolvable:$true] %s101
      %s103 = sshll.u32 %s5, 4
      %s104 = int_to_ptr.hbm [resolvable:$true] %s103
      %109 = dma.vmem_to_hbm [thread:$0]  %s102, 256, %s104, [#allocation3], 128, 128, 8
    $region25: #{tpu_custom_call.1} parent=1 // pred_fallthru
      _
    // Predicated region
    $region26: #{tpu_custom_call.1} parent=1 // pred_check
      _
    $region27: #{tpu_custom_call.1} parent=1 // pred_check_branch
      %111 = sbr.rel (0) target = $region29
    $region28: #{tpu_custom_call.1} parent=1 // pred_region
      %113 = dma.done [#allocation3], 256
    $region29: #{tpu_custom_call.1} parent=1 // pred_fallthru
      _
    %114 = vsyncpa [#allocation3], 1

</llo_original>
